<compile_context>
chip_gen: v7x
topology: tpu7x:2x2x1
jax: 0.10.0
libtpu: 0.0.40
codegen_flags: <defaults>
</compile_context>

<pallas_src>
from functools import partial

import jax
import jax.numpy as jnp
from jax.experimental import pallas as pl
from jax.experimental.pallas import tpu as pltpu

NEG_SLOPE = 0.01  # PyTorch nn.LeakyReLU default
_MIB = 1024 * 1024


def _leaky_relu(h):
    return jnp.where(h > 0, h, NEG_SLOPE * h)


def _round_up(v, m):
    return ((v + m - 1) // m) * m


def _mlp_head(pooled, w1, b1, w2, b2):
    """Shared MLP + sigmoid tail.  'max' and 'avg' branches are bit-identical in
    the reference (both use max pool), so run the MLP once and sum with itself."""
    h = jnp.dot(pooled, w1, preferred_element_type=jnp.float32) + b1
    h = _leaky_relu(h)
    h = jnp.dot(h, w2, preferred_element_type=jnp.float32) + b2
    h = _leaky_relu(h)
    return jax.nn.sigmoid(h + h)


# ---------------------------------------------------------------------------
# Kernels
# ---------------------------------------------------------------------------
def _cw_kernel_single(x_ref, w1_ref, b1_ref, w2_ref, b2_ref, out_ref):
    """Full-spatial path: block = (bn, C, H*W); one step does pool + MLP."""
    pooled = jnp.max(x_ref[...], axis=-1).astype(jnp.float32)          # (bn, C)
    out_ref[...] = _mlp_head(pooled, w1_ref[...], b1_ref[...], w2_ref[...], b2_ref[...])


def _cw_kernel_tiled(x_ref, w1_ref, b1_ref, w2_ref, b2_ref, out_ref, pool_ref, *, hw):
    """Spatially tiled path: block = (bn, C, thw); running max accumulator in VMEM.

    The per-step work is dominated by the vreg-folding VPU maxes of jnp.max over
    the lane axis; the small (bn, C) relayout per step is noise at multi-MiB tiles
    (so the (bn, C, 128)-accumulator variant was not worth its lowering risk).
    """
    k = pl.program_id(1)

    @pl.when(k == 0)
    def _init():
        # Must be -inf (not zero) or all-negative channels would clamp to 0.
        pool_ref[...] = jnp.full_like(pool_ref, -jnp.inf)

    x = x_ref[...]
    thw = x.shape[-1]
    if hw % thw != 0:
        # cdiv grid: the last spatial block is padded with unspecified values on
        # input -> mask padding lanes to -inf before the max.
        lane = jax.lax.broadcasted_iota(jnp.int32, x.shape, dimension=2)
        x = jnp.where(k * thw + lane < hw, x, jnp.asarray(-jnp.inf, dtype=x.dtype))

    pool_ref[...] = jnp.maximum(pool_ref[...], jnp.max(x, axis=-1).astype(jnp.float32))

    @pl.when(k == pl.num_programs(1) - 1)
    def _finalize():
        out_ref[...] = _mlp_head(pool_ref[...], w1_ref[...], b1_ref[...],
                                 w2_ref[...], b2_ref[...])


# ---------------------------------------------------------------------------
# Tiling heuristics
# ---------------------------------------------------------------------------
def _vmem_capacity_bytes():
    try:
        return int(pltpu.get_tpu_info().vmem_capacity_bytes)
    except Exception:
        return 128 * _MIB  # v5e/v6e default; resulting tiles also fit v7x's 64 MiB


def _pick_bn(n, max_bn):
    """Batch-block size: a multiple of 8 (sublane rule for the (bn, C) output
    block) or the full batch.  For n >= 16, split into >= 2 blocks so the
    'parallel' grid axis can be sharded across both v7x TensorCores."""
    max_bn = max(1, min(n, max_bn))
    if max_bn >= n:
        if n >= 16:
            bn = _round_up(-(-n // 2), 8)   # ceil(n/2) rounded up to 8
            if bn < n:
                return bn
        return n
    if max_bn >= 8:
        return (max_bn // 8) * 8
    # Fewer than 8 samples fit the nominal budget but the batch is larger: use one
    # sublane group anyway (slightly over budget; vmem_limit below accounts for it).
    return min(8, n)


# ---------------------------------------------------------------------------
# Wrapper
# ---------------------------------------------------------------------------
def channel_weight_forward(x, w1, b1, w2, b2, *, tile_budget_bytes=None):
    """Channel_Weight forward.  x: (N, C, H, W) -> (N, C, 1, 1) float32."""
    N, C, H, W = x.shape
    assert C == w1.shape[0], "Channel_Weight hard-wires the MLP to the channel count"
    HW = H * W
    HID = w1.shape[1]
    itemsize = x.dtype.itemsize

    x_flat = x.reshape(N, C, HW)
    b1r = b1.reshape(1, HID).astype(jnp.float32)
    b2r = b2.reshape(1, C).astype(jnp.float32)

    c_pad = _round_up(C, 8)
    vmem_cap = _vmem_capacity_bytes()
    # Generation-aware streaming-tile budget: ~1/8 of physical VMEM, clamped to
    # [4, 16] MiB  ->  16 MiB on v5e/v6e (128 MiB VMEM), 8 MiB on v7x (64 MiB VMEM).
    if tile_budget_bytes is None:
        tile_budget = int(min(16 * _MIB, max(4 * _MIB, vmem_cap // 8)))
    else:
        tile_budget = int(tile_budget_bytes)

    row_bytes = c_pad * _round_up(HW, 128) * itemsize   # one sample, full H*W, VMEM layout
    bn_min = N if N < 8 else 8

    if bn_min * row_bytes <= tile_budget:
        # Preferred: full per-sample spatial block, single "parallel" grid axis.
        thw = HW
        spatial_tiled = False
        bn = _pick_bn(N, tile_budget // row_bytes)
    else:
        # Huge H*W: spatial tiling with a running max accumulator.
        bn = bn_min
        max_lanes = max(128, tile_budget // (bn * c_pad * itemsize))
        thw = (max_lanes // 128) * 128
        if thw >= HW:
            thw = HW
            spatial_tiled = False
        else:
            spatial_tiled = True

    # Explicit VMEM limit from the actual double-buffered footprint (+ margin).
    in_tile_bytes = bn * c_pad * _round_up(thw, 128) * itemsize
    out_tile_bytes = _round_up(bn, 8) * _round_up(C, 128) * 4
    w_bytes = 4 * (c_pad * _round_up(HID, 128) + 8 * _round_up(HID, 128)
                   + _round_up(HID, 8) * _round_up(C, 128) + 8 * _round_up(C, 128))
    scratch_bytes = out_tile_bytes if spatial_tiled else 0
    vmem_limit = 2 * in_tile_bytes + 2 * out_tile_bytes + 2 * w_bytes + scratch_bytes + 4 * _MIB
    vmem_limit = int(min(vmem_cap, max(vmem_limit, 32 * _MIB)))

    cost = pl.CostEstimate(
        flops=N * C * HW + 4 * N * C * HID,
        transcendentals=N * C,
        bytes_accessed=x.size * itemsize + (C * HID + HID + HID * C + C) * 4 + N * C * 4,
    )

    if not spatial_tiled:
        out = pl.pallas_call(
            _cw_kernel_single,
            out_shape=jax.ShapeDtypeStruct((N, C), jnp.float32),
            grid=(pl.cdiv(N, bn),),
            in_specs=[
                pl.BlockSpec((bn, C, HW), lambda i: (i, 0, 0)),
                pl.BlockSpec((C, HID), lambda i: (0, 0)),
                pl.BlockSpec((1, HID), lambda i: (0, 0)),
                pl.BlockSpec((HID, C), lambda i: (0, 0)),
                pl.BlockSpec((1, C), lambda i: (0, 0)),
            ],
            out_specs=pl.BlockSpec((bn, C), lambda i: (i, 0)),
            compiler_params=pltpu.CompilerParams(
                dimension_semantics=("parallel",),
                vmem_limit_bytes=vmem_limit,
            ),
            cost_estimate=cost,
        )(x_flat, w1, b1r, w2, b2r)
    else:
        out = pl.pallas_call(
            partial(_cw_kernel_tiled, hw=HW),
            out_shape=jax.ShapeDtypeStruct((N, C), jnp.float32),
            grid=(pl.cdiv(N, bn), pl.cdiv(HW, thw)),
            in_specs=[
                pl.BlockSpec((bn, C, thw), lambda i, k: (i, 0, k)),
                pl.BlockSpec((C, HID), lambda i, k: (0, 0)),
                pl.BlockSpec((1, HID), lambda i, k: (0, 0)),
                pl.BlockSpec((HID, C), lambda i, k: (0, 0)),
                pl.BlockSpec((1, C), lambda i, k: (0, 0)),
            ],
            out_specs=pl.BlockSpec((bn, C), lambda i, k: (i, 0)),
            scratch_shapes=[pltpu.VMEM((bn, C), jnp.float32)],
            compiler_params=pltpu.CompilerParams(
                dimension_semantics=("parallel", "arbitrary"),
                vmem_limit_bytes=vmem_limit,
            ),
            cost_estimate=cost,
        )(x_flat, w1, b1r, w2, b2r)

    return out.reshape(N, C, 1, 1)


def init_params(key, c_in=21, hidden=64):
    """Deterministic init mimicking PyTorch Linear defaults (uniform +/- 1/sqrt(fan_in)).
    Weights stored as (in_features, out_features) so the kernel does plain matmuls."""
    k1, k2, k3, k4 = jax.random.split(key, 4)
    bound1 = 1.0 / jnp.sqrt(c_in)
    bound2 = 1.0 / jnp.sqrt(hidden)
    w1 = jax.random.uniform(k1, (c_in, hidden), jnp.float32, -bound1, bound1)
    b1 = jax.random.uniform(k2, (hidden,), jnp.float32, -bound1, bound1)
    w2 = jax.random.uniform(k3, (hidden, c_in), jnp.float32, -bound2, bound2)
    b2 = jax.random.uniform(k4, (c_in,), jnp.float32, -bound2, bound2)
    return w1, b1, w2, b2


if __name__ == "__main__":
    key = jax.random.PRNGKey(0)
    k_p, k_x1, k_x2, k_x3 = jax.random.split(key, 4)

    C, HID = 21, 64  # Channel_Weight hard-wires Linear(21, 64)
    w1, b1, w2, b2 = init_params(k_p, c_in=C, hidden=HID)

    def reference(x):
        pooled = jnp.max(x.reshape(x.shape[0], x.shape[1], -1), axis=-1)
        h = _leaky_relu(pooled @ w1 + b1)
        h = _leaky_relu(h @ w2 + b2)
        return jax.nn.sigmoid(h + h).reshape(x.shape[0], x.shape[1], 1, 1)

    def check(x, **kw):
        out = channel_weight_forward(x, w1, b1, w2, b2, **kw)
        jax.block_until_ready(out)
        ref = reference(x)
        assert out.shape == ref.shape
        err = float(jnp.max(jnp.abs(out - ref)))
        assert jnp.allclose(out, ref, atol=1e-4, rtol=1e-4), err

    # 1) Module-sized case (size == 16): single-shot full-(C*H*W) block path.
    check(jax.random.normal(k_x1, (2, C, 16, 16), dtype=jnp.float32))
    # 2) Larger batch: cdiv batch grid with >= 2 "parallel" steps and a partial tail block.
    check(jax.random.normal(k_x2, (20, C, 16, 16), dtype=jnp.float32))
    # 3) Spatially tiled path with a non-128-multiple H*W (exercises tail-lane masking
    #    and the running-max accumulator) by shrinking the tile budget.
    check(jax.random.normal(k_x3, (3, C, 31, 31), dtype=jnp.float32),
          tile_budget_bytes=128 * 1024)

    print("KERNEL_OK")
</pallas_src>

<mosaic_0001>
module attributes {stable_mosaic.version = 11 : i64} {
  func.func @_cw_kernel_single(%arg0: i32, %arg1: memref<2x21x256xf32, #tpu.memory_space<vmem>>, %arg2: memref<21x64xf32, #tpu.memory_space<vmem>>, %arg3: memref<1x64xf32, #tpu.memory_space<vmem>>, %arg4: memref<64x21xf32, #tpu.memory_space<vmem>>, %arg5: memref<1x21xf32, #tpu.memory_space<vmem>>, %arg6: memref<2x21xf32, #tpu.memory_space<vmem>>) attributes {dimension_semantics = [#tpu.dimension_semantics<parallel>], iteration_bounds = array<i64: 1>, scalar_prefetch = 0 : i64, scratch_operands = 0 : i64, tpu.core_type = #tpu.core_type<tc>, window_params = [{transform_indices = @transform_0, window_bounds = array<i64: 2, 21, 256>}, {pipeline_mode = #tpu.pipeline_mode<synchronous>, transform_indices = @transform_1, window_bounds = array<i64: 21, 64>}, {pipeline_mode = #tpu.pipeline_mode<synchronous>, transform_indices = @transform_2, window_bounds = array<i64: 1, 64>}, {pipeline_mode = #tpu.pipeline_mode<synchronous>, transform_indices = @transform_3, window_bounds = array<i64: 64, 21>}, {pipeline_mode = #tpu.pipeline_mode<synchronous>, transform_indices = @transform_4, window_bounds = array<i64: 1, 21>}, {transform_indices = @transform_5, window_bounds = array<i64: 2, 21>}]} {
    %c0 = arith.constant 0 : index
    %c0_0 = arith.constant 0 : index
    %c0_1 = arith.constant 0 : index
    %0 = vector.load %arg1[%c0, %c0_0, %c0_1] : memref<2x21x256xf32, #tpu.memory_space<vmem>>, vector<2x21x256xf32>
    %cst = arith.constant dense<0xFF800000> : vector<2x21xf32>
    %1 = vector.multi_reduction <maximumf>, %0, %cst [2] : vector<2x21x256xf32> to vector<2x21xf32>
    %c0_2 = arith.constant 0 : index
    %c0_3 = arith.constant 0 : index
    %2 = vector.load %arg2[%c0_2, %c0_3] : memref<21x64xf32, #tpu.memory_space<vmem>>, vector<21x64xf32>
    %c0_4 = arith.constant 0 : index
    %c0_5 = arith.constant 0 : index
    %3 = vector.load %arg3[%c0_4, %c0_5] : memref<1x64xf32, #tpu.memory_space<vmem>>, vector<1x64xf32>
    %c0_6 = arith.constant 0 : index
    %c0_7 = arith.constant 0 : index
    %4 = vector.load %arg4[%c0_6, %c0_7] : memref<64x21xf32, #tpu.memory_space<vmem>>, vector<64x21xf32>
    %c0_8 = arith.constant 0 : index
    %c0_9 = arith.constant 0 : index
    %5 = vector.load %arg5[%c0_8, %c0_9] : memref<1x21xf32, #tpu.memory_space<vmem>>, vector<1x21xf32>
    %cst_10 = arith.constant dense<0.000000e+00> : vector<2x64xf32>
    %6 = tpu.matmul %1, %2, %cst_10 {dimension_numbers = #tpu.dot_dimension_numbers<[1], [0], [0], [1], [0, 0, 1, 1], [], []>} : vector<2x21xf32>, vector<21x64xf32>, vector<2x64xf32> -> vector<2x64xf32>
    %7 = vector.broadcast %3 : vector<1x64xf32> to vector<2x64xf32>
    %8 = arith.addf %6, %7 : vector<2x64xf32>
    %cst_11 = arith.constant 0.000000e+00 : f32
    %9 = vector.broadcast %cst_11 : f32 to vector<2x64xf32>
    %10 = arith.cmpf ogt, %8, %9 : vector<2x64xf32>
    %cst_12 = arith.constant 0.00999999977 : f32
    %11 = vector.broadcast %cst_12 : f32 to vector<2x64xf32>
    %12 = arith.mulf %11, %8 : vector<2x64xf32>
    %13 = arith.select %10, %8, %12 : vector<2x64xi1>, vector<2x64xf32>
    %cst_13 = arith.constant dense<0.000000e+00> : vector<2x21xf32>
    %14 = tpu.matmul %13, %4, %cst_13 {dimension_numbers = #tpu.dot_dimension_numbers<[1], [0], [0], [1], [0, 0, 1, 1], [], []>} : vector<2x64xf32>, vector<64x21xf32>, vector<2x21xf32> -> vector<2x21xf32>
    %15 = vector.broadcast %5 : vector<1x21xf32> to vector<2x21xf32>
    %16 = arith.addf %14, %15 : vector<2x21xf32>
    %cst_14 = arith.constant 0.000000e+00 : f32
    %17 = vector.broadcast %cst_14 : f32 to vector<2x21xf32>
    %18 = arith.cmpf ogt, %16, %17 : vector<2x21xf32>
    %cst_15 = arith.constant 0.00999999977 : f32
    %19 = vector.broadcast %cst_15 : f32 to vector<2x21xf32>
    %20 = arith.mulf %19, %16 : vector<2x21xf32>
    %21 = arith.select %18, %16, %20 : vector<2x21xi1>, vector<2x21xf32>
    %22 = arith.addf %21, %21 : vector<2x21xf32>
    %23 = arith.negf %22 : vector<2x21xf32>
    %24 = math.exp %23 : vector<2x21xf32>
    %cst_16 = arith.constant 1.000000e+00 : f32
    %25 = vector.broadcast %cst_16 : f32 to vector<2x21xf32>
    %26 = arith.addf %25, %24 : vector<2x21xf32>
    %27 = arith.divf %25, %26 : vector<2x21xf32>
    %c0_17 = arith.constant 0 : index
    %c0_18 = arith.constant 0 : index
    %28 = vector.load %arg6[%c0_17, %c0_18] : memref<2x21xf32, #tpu.memory_space<vmem>>, vector<2x21xf32>
    tpu.vector_store %arg6[%c0_17, %c0_18], %27 {strides = array<i32>} : memref<2x21xf32, #tpu.memory_space<vmem>>, vector<2x21xf32>,
    return
  }
  func.func @transform_0(%arg0: i32) -> (i32, i32, i32) {
    %c0_i32 = arith.constant 0 : i32
    %c0_i32_0 = arith.constant 0 : i32
    %c0_i32_1 = arith.constant 0 : i32
    return %arg0, %c0_i32, %c0_i32_0 : i32, i32, i32
  }
  func.func @transform_1(%arg0: i32) -> (i32, i32) {
    %c0_i32 = arith.constant 0 : i32
    %c0_i32_0 = arith.constant 0 : i32
    %c0_i32_1 = arith.constant 0 : i32
    return %c0_i32, %c0_i32_0 : i32, i32
  }
  func.func @transform_2(%arg0: i32) -> (i32, i32) {
    %c0_i32 = arith.constant 0 : i32
    %c0_i32_0 = arith.constant 0 : i32
    %c0_i32_1 = arith.constant 0 : i32
    return %c0_i32, %c0_i32_0 : i32, i32
  }
  func.func @transform_3(%arg0: i32) -> (i32, i32) {
    %c0_i32 = arith.constant 0 : i32
    %c0_i32_0 = arith.constant 0 : i32
    %c0_i32_1 = arith.constant 0 : i32
    return %c0_i32, %c0_i32_0 : i32, i32
  }
  func.func @transform_4(%arg0: i32) -> (i32, i32) {
    %c0_i32 = arith.constant 0 : i32
    %c0_i32_0 = arith.constant 0 : i32
    %c0_i32_1 = arith.constant 0 : i32
    return %c0_i32, %c0_i32_0 : i32, i32
  }
  func.func @transform_5(%arg0: i32) -> (i32, i32) {
    %c0_i32 = arith.constant 0 : i32
    %c0_i32_0 = arith.constant 0 : i32
    return %arg0, %c0_i32 : i32, i32
  }
}

</mosaic_0001>

<llo_original>
// kernel: tpu_custom_call.1
$region0: #{tpu_custom_call.1}
  #allocation0 [shape = 'u32[]', space=smem, size = 0x4, offset = 0x4, fixed_abs, tag = 'smem constant byte address 0x4 - core index']
  #allocation1 [shape = 'u32[144,128]{1,0:T(1,128)}', space=vmem, size = 0x12000, scoped, tag = 'internal scratch']
  %s0 = inlined_call_operand.vmem [shape: f32[2,21,256], index: 0, kind: input, shape index: {}]
  %s1 = inlined_call_operand.vmem [shape: f32[21,64], index: 1, kind: input, shape index: {}]
  %s2 = inlined_call_operand.vmem [shape: f32[1,64], index: 2, kind: input, shape index: {}]
  %s3 = inlined_call_operand.vmem [shape: f32[64,21], index: 3, kind: input, shape index: {}]
  %s4 = inlined_call_operand.vmem [shape: f32[1,21], index: 4, kind: input, shape index: {}]
  %s5 = inlined_call_operand.hbm [shape: f32[2,21], index: 5, kind: output, shape index: {}]
  %s6 = sld [smem:[#allocation0]]
  $region30: #{tpu_custom_call.1} parent=0
    _
  %s8 = ssub.s32 1, %s6
  %s9 = scalar_select 0, %s8, %s6
  $region1: #{tpu_custom_call.1} parent=0
    #allocation2 [shape = 'u8[1024]{0}', space=vmem, size = 0x400, scoped, tag = 'output window, operand 0, single buffered']
    #allocation3 [shape = 's32[1]{0}', space=sflag, size = 0x4, scoped, tag = 'scoped memory for tpu_custom_call.1']
    %10 = vsyncpa [#allocation3], 0
    // Predicated region
    $region2: #{tpu_custom_call.1} parent=1 // pred_check
      _
    $region3: #{tpu_custom_call.1} parent=1 // pred_check_branch
      %12 = sbr.rel (0) target = $region5
    $region4: #{tpu_custom_call.1} parent=1 // pred_region
      _
    $region5: #{tpu_custom_call.1} parent=1 // pred_fallthru
      _
    // Predicated region
    $region6: #{tpu_custom_call.1} parent=1 // pred_check
      _
    $region7: #{tpu_custom_call.1} parent=1 // pred_check_branch
      %14 = sbr.rel (0) target = $region9
    $region8: #{tpu_custom_call.1} parent=1 // pred_region
      _
    $region9: #{tpu_custom_call.1} parent=1 // pred_fallthru
      _
    // Predicated region
    $region10: #{tpu_custom_call.1} parent=1 // pred_check
      _
    $region11: #{tpu_custom_call.1} parent=1 // pred_check_branch
      %16 = sbr.rel (0) target = $region13
    $region12: #{tpu_custom_call.1} parent=1 // pred_region
      _
    $region13: #{tpu_custom_call.1} parent=1 // pred_fallthru
      _
    // Predicated region
    $region14: #{tpu_custom_call.1} parent=1 // pred_check
      _
    $region15: #{tpu_custom_call.1} parent=1 // pred_check_branch
      %18 = sbr.rel (0) target = $region17
    $region16: #{tpu_custom_call.1} parent=1 // pred_region
      _
    $region17: #{tpu_custom_call.1} parent=1 // pred_fallthru
      _
    // Predicated region
    $region18: #{tpu_custom_call.1} parent=1 // pred_check
      _
    $region19: #{tpu_custom_call.1} parent=1 // pred_check_branch
      %20 = sbr.rel (0) target = $region21
    $region20: #{tpu_custom_call.1} parent=1 // pred_region
      _
    $region21: #{tpu_custom_call.1} parent=1 // pred_fallthru
      _
    %v21 = vld [vmem:[%s0] sm:$0xff]
    %v22 = vld [vmem:[%s0 + $0x8] sm:$0xff]
    %v23 = vld [vmem:[%s0 + $0x10] sm:$0xff]
    %v24 = vld [vmem:[%s0 + $0x18] sm:$0xff]
    %v25 = vld [vmem:[%s0 + $0x20] sm:$0x1f]
    %v26 = vld [vmem:[%s0 + $0x28] sm:$0x1f]
    %v27 = vld [vmem:[%s0 + $0x30] sm:$0xff]
    %v28 = vld [vmem:[%s0 + $0x38] sm:$0xff]
    %v29 = vld [vmem:[%s0 + $0x40] sm:$0xff]
    %v30 = vld [vmem:[%s0 + $0x48] sm:$0xff]
    %v31 = vld [vmem:[%s0 + $0x50] sm:$0x1f]
    %v32 = vld [vmem:[%s0 + $0x58] sm:$0x1f]
    %v33 = vmax.f32 %v21, %v22
    %34 = vmax.xlane.f32.xlu0 %v33
    %v35 = vpop.xlane.xlu0 %34
    %v36 = vmax.f32 %v23, %v24
    %37 = vmax.xlane.f32.xlu0 %v36
    %v38 = vpop.xlane.xlu0 %37
    %vm39 = vcmask 1044480
    %v40 = vsel %vm39, %v25, -inf
    %v41 = vsel %vm39, %v26, -inf
    %v42 = vmax.f32 %v40, %v41
    %43 = vmax.xlane.f32.xlu0 %v42
    %v44 = vpop.xlane.xlu0 %43
    %v45 = vmax.f32 %v27, %v28
    %46 = vmax.xlane.f32.xlu0 %v45
    %v47 = vpop.xlane.xlu0 %46
    %v48 = vmax.f32 %v29, %v30
    %49 = vmax.xlane.f32.xlu0 %v48
    %v50 = vpop.xlane.xlu0 %49
    %v51 = vsel %vm39, %v31, -inf
    %v52 = vsel %vm39, %v32, -inf
    %v53 = vmax.f32 %v51, %v52
    %54 = vmax.xlane.f32.xlu0 %v53
    %v55 = vpop.xlane.xlu0 %54
    %v56 = vld [vmem:[%s1] sm:$0xff]
    %v57 = vld [vmem:[%s1 + $0x8] sm:$0xff]
    %v58 = vld [vmem:[%s1 + $0x10] sm:$0x1f]
    %v59 = vld [vmem:[%s2] sm:$0x1]
    %v60 = vld [vmem:[%s3] sm:$0xff]
    %v61 = vld [vmem:[%s3 + $0x8] sm:$0xff]
    %v62 = vld [vmem:[%s3 + $0x10] sm:$0xff]
    %v63 = vld [vmem:[%s3 + $0x18] sm:$0xff]
    %v64 = vld [vmem:[%s3 + $0x20] sm:$0xff]
    %v65 = vld [vmem:[%s3 + $0x28] sm:$0xff]
    %v66 = vld [vmem:[%s3 + $0x30] sm:$0xff]
    %v67 = vld [vmem:[%s3 + $0x38] sm:$0xff]
    %v68 = vld [vmem:[%s4] sm:$0x1]
    %v70 = vlaneseq
    %v71 = vshrl.u32 %v70, 7
    %v72 = vsub.s32 0, %v71
    %v73 = vrot.slane %v59, %v72
    %v81 = vlaneseq
    %v82 = vand.u32 %v81, 127
    %v83 = vlaneseq
    %v84 = vshrl.u32 %v83, 7
    %v85 = vsub.s32 %v82, %v84
    %v86 = vrot.slane %v35, %v85
    %v87 = vadd.s32 %v82, 4294967288
    %v88 = vlaneseq
    %v89 = vshrl.u32 %v88, 7
    %v90 = vsub.s32 %v87, %v89
    %v91 = vrot.slane %v38, %v90
    %vm92 = vcmask 130112
    %v93 = vsel %vm92, %v91, %v86
    %v94 = vadd.s32 %v82, 4294967280
    %v95 = vlaneseq
    %v96 = vshrl.u32 %v95, 7
    %v97 = vsub.s32 %v94, %v96
    %v98 = vrot.slane %v44, %v97
    %vm99 = vcmask 195712
    %v100 = vsel %vm99, %v98, %v93
    %v101 = vlaneseq
    %v102 = vshrl.u32 %v101, 7
    %v103 = vsub.s32 %v82, %v102
    %v104 = vrot.slane %v47, %v103
    %v105 = vlaneseq
    %v106 = vshrl.u32 %v105, 7
    %v107 = vsub.s32 %v87, %v106
    %v108 = vrot.slane %v50, %v107
    %v109 = vsel %vm92, %v108, %v104
    %v110 = vlaneseq
    %v111 = vshrl.u32 %v110, 7
    %v112 = vsub.s32 %v94, %v111
    %v113 = vrot.slane %v55, %v112
    %v114 = vsel %vm99, %v113, %v109
    %vm115 = vcmask 1041409
    %v116 = vsel %vm115, %v114, %v100
    %vm117 = vcmask 171008
    %v118 = vsel %vm117, %v116, 0
    %v121 = vsel %vm39, %v58, 0
    %123 = vmatprep.subr.mxu0 0.0
    %124 = vmatpush1.msra.mxu0 %v56
    %125 = vmatprep.subr.mxu0 0.0
    %126 = vmatpush1.msra.mxu0 %v57
    %127 = vmatprep.subr.mxu0 0.0
    %128 = vmatpush1.msra.mxu0 %v121
    %129 = vmatprep.subr.mxu0 0.0
    %130 = vmatpush1.msra.mxu0 0.0
    %131 = vmatprep.subr.mxu0 0.0
    %132 = vmatpush1.msra.mxu0 0.0
    %133 = vmatprep.subr.mxu0 0.0
    %134 = vmatpush1.msra.mxu0 0.0
    %135 = vmatprep.subr.mxu0 0.0
    %136 = vmatpush1.msra.mxu0 0.0
    %137 = vmatprep.subr.mxu0 0.0
    %138 = vmatpush1.msra.mxu0 0.0
    %139 = vmatprep.subr.mxu0 0.0
    %140 = vmatpush1.msra.mxu0 0.0
    %141 = vmatprep.subr.mxu0 0.0
    %142 = vmatpush1.msra.mxu0 0.0
    %143 = vmatprep.subr.mxu0 0.0
    %144 = vmatpush1.msra.mxu0 0.0
    %145 = vmatprep.subr.mxu0 0.0
    %146 = vmatpush1.msra.mxu0 0.0
    %147 = vmatprep.subr.mxu0 0.0
    %148 = vmatpush1.msra.mxu0 0.0
    %149 = vmatprep.subr.mxu0 0.0
    %150 = vmatpush1.msra.mxu0 0.0
    %151 = vmatprep.subr.mxu0 0.0
    %152 = vmatpush1.msra.mxu0 0.0
    %153 = vmatprep.subr.mxu0 0.0
    %154 = vmatpush1.msra.mxu0 0.0
    %155 = vmatprep.subr.mxu0 0.0
    %156 = vmatpush1.msra.mxu0 0.0
    %157 = vmatprep.subr.mxu0 0.0
    %158 = vmatpush1.msra.mxu0 0.0
    %159 = vmatprep.subr.mxu0 0.0
    %160 = vmatpush1.msra.mxu0 0.0
    %161 = vmatprep.subr.mxu0 0.0
    %162 = vmatpush1.msra.mxu0 0.0
    %163 = vmatprep.subr.mxu0 0.0
    %164 = vmatpush1.msra.mxu0 0.0
    %165 = vmatprep.subr.mxu0 0.0
    %166 = vmatpush1.msra.mxu0 0.0
    %167 = vmatprep.subr.mxu0 0.0
    %168 = vmatpush1.msra.mxu0 0.0
    %169 = vmatprep.subr.mxu0 0.0
    %170 = vmatpush1.msra.mxu0 0.0
    %171 = vmatprep.subr.mxu0 0.0
    %172 = vmatpush1.msra.mxu0 0.0
    %173 = vmatprep.subr.mxu0 0.0
    %174 = vmatpush1.msra.mxu0 0.0
    %175 = vmatprep.subr.mxu0 0.0
    %176 = vmatpush1.msra.mxu0 0.0
    %177 = vmatprep.subr.mxu0 0.0
    %178 = vmatpush1.msra.mxu0 0.0
    %179 = vmatprep.subr.mxu0 0.0
    %180 = vmatpush1.msra.mxu0 0.0
    %181 = vmatprep.subr.mxu0 0.0
    %182 = vmatpush1.msra.mxu0 0.0
    %183 = vmatprep.subr.mxu0 0.0
    %184 = vmatpush1.msra.mxu0 0.0
    %185 = vmatprep.subr.mxu0 0.0
    %186 = vmatpush1.msra.mxu0 0.0
    %187 = vmatprep.mubr.f32.mxu0 0.0
    %188 = vmatmul.mubr.f32.gmra.mrb[0].mxu0 %v118
    %v189 = vpop.f32.mrb[0].mxu0
    %v190 = vadd.f32 %v73, %v189
    %v191 = vpop.f32.mrb[0].mxu0
    %192 = vdwg.mxu0
    %vm193 = vcmp.gt.f32.partialorder %v190, 0.0
    %v194 = vmul.f32 %v190, 0.01
    %v195 = vsel %vm193, %v190, %v194
    %v197 = vlaneseq
    %v198 = vshrl.u32 %v197, 7
    %v199 = vsub.s32 0, %v198
    %v200 = vrot.slane %v68, %v199
    %vm202 = vcmask 523264
    %v204 = vsel %vm202, %v195, 0
    %206 = vmatprep.subr.mxu0 0.0
    %207 = vmatpush1.msra.mxu0 %v60
    %208 = vmatprep.subr.mxu0 0.0
    %209 = vmatpush1.msra.mxu0 %v61
    %210 = vmatprep.subr.mxu0 0.0
    %211 = vmatpush1.msra.mxu0 %v62
    %212 = vmatprep.subr.mxu0 0.0
    %213 = vmatpush1.msra.mxu0 %v63
    %214 = vmatprep.subr.mxu0 0.0
    %215 = vmatpush1.msra.mxu0 %v64
    %216 = vmatprep.subr.mxu0 0.0
    %217 = vmatpush1.msra.mxu0 %v65
    %218 = vmatprep.subr.mxu0 0.0
    %219 = vmatpush1.msra.mxu0 %v66
    %220 = vmatprep.subr.mxu0 0.0
    %221 = vmatpush1.msra.mxu0 %v67
    %222 = vmatprep.subr.mxu0 0.0
    %223 = vmatpush1.msra.mxu0 0.0
    %224 = vmatprep.subr.mxu0 0.0
    %225 = vmatpush1.msra.mxu0 0.0
    %226 = vmatprep.subr.mxu0 0.0
    %227 = vmatpush1.msra.mxu0 0.0
    %228 = vmatprep.subr.mxu0 0.0
    %229 = vmatpush1.msra.mxu0 0.0
    %230 = vmatprep.subr.mxu0 0.0
    %231 = vmatpush1.msra.mxu0 0.0
    %232 = vmatprep.subr.mxu0 0.0
    %233 = vmatpush1.msra.mxu0 0.0
    %234 = vmatprep.subr.mxu0 0.0
    %235 = vmatpush1.msra.mxu0 0.0
    %236 = vmatprep.subr.mxu0 0.0
    %237 = vmatpush1.msra.mxu0 0.0
    %238 = vmatprep.subr.mxu0 0.0
    %239 = vmatpush1.msra.mxu0 0.0
    %240 = vmatprep.subr.mxu0 0.0
    %241 = vmatpush1.msra.mxu0 0.0
    %242 = vmatprep.subr.mxu0 0.0
    %243 = vmatpush1.msra.mxu0 0.0
    %244 = vmatprep.subr.mxu0 0.0
    %245 = vmatpush1.msra.mxu0 0.0
    %246 = vmatprep.subr.mxu0 0.0
    %247 = vmatpush1.msra.mxu0 0.0
    %248 = vmatprep.subr.mxu0 0.0
    %249 = vmatpush1.msra.mxu0 0.0
    %250 = vmatprep.subr.mxu0 0.0
    %251 = vmatpush1.msra.mxu0 0.0
    %252 = vmatprep.subr.mxu0 0.0
    %253 = vmatpush1.msra.mxu0 0.0
    %254 = vmatprep.subr.mxu0 0.0
    %255 = vmatpush1.msra.mxu0 0.0
    %256 = vmatprep.subr.mxu0 0.0
    %257 = vmatpush1.msra.mxu0 0.0
    %258 = vmatprep.subr.mxu0 0.0
    %259 = vmatpush1.msra.mxu0 0.0
    %260 = vmatprep.subr.mxu0 0.0
    %261 = vmatpush1.msra.mxu0 0.0
    %262 = vmatprep.subr.mxu0 0.0
    %263 = vmatpush1.msra.mxu0 0.0
    %264 = vmatprep.subr.mxu0 0.0
    %265 = vmatpush1.msra.mxu0 0.0
    %266 = vmatprep.subr.mxu0 0.0
    %267 = vmatpush1.msra.mxu0 0.0
    %268 = vmatprep.subr.mxu0 0.0
    %269 = vmatpush1.msra.mxu0 0.0
    %270 = vmatprep.mubr.f32.mxu0 0.0
    %271 = vmatmul.mubr.f32.gmra.mrb[0].mxu0 %v204
    %v272 = vpop.f32.mrb[0].mxu0
    %v273 = vadd.f32 %v200, %v272
    %v274 = vpop.f32.mrb[0].mxu0
    %275 = vdwg.mxu0
    %vm276 = vcmp.gt.f32.partialorder %v273, 0.0
    %v277 = vmul.f32 %v273, 0.01
    %v278 = vsel %vm276, %v273, %v277
    %v279 = vadd.f32 %v278, %v278
    %v280 = vxor.u32 %v279, 2147483648
    %v281 = vmul.f32 %v280, 1.442695
    %v282 = vpow.pop %v281
    %v283 = vadd.f32 %v282, 1.0
    %v284 = vrcp.pop %v283
    %v285 = vmul.f32 1.0, %v284
    %vm286 = vcmask 164864
    %287 = vst.msk [vmem:[#allocation2] sm:$0x3] %vm286, %v285
    // Predicated region
    $region22: #{tpu_custom_call.1} parent=1 // pred_check
      _
    $region23: #{tpu_custom_call.1} parent=1 // pred_check_branch
      %289 = sbr.rel (0) target = $region25
    $region24: #{tpu_custom_call.1} parent=1 // pred_region
      %s291 = ssub.s32 32, 32
      %292 = vsyncadd [#allocation3], %s291
      %s294 = sshll.u32 [#allocation2], 4
      %s295 = int_to_ptr.vmem [resolvable:$true] %s294
      %297 = dma.vmem_to_hbm [thread:$0]  %s295, 32, %s5, [#allocation3]
    $region25: #{tpu_custom_call.1} parent=1 // pred_fallthru
      _
    // Predicated region
    $region26: #{tpu_custom_call.1} parent=1 // pred_check
      _
    $region27: #{tpu_custom_call.1} parent=1 // pred_check_branch
      %299 = sbr.rel (0) target = $region29
    $region28: #{tpu_custom_call.1} parent=1 // pred_region
      %300 = dma.done [#allocation3], 32
    $region29: #{tpu_custom_call.1} parent=1 // pred_fallthru
      _
    %301 = vsyncpa [#allocation3], 1

</llo_original>
